<compile_context>
chip_gen: v5e
topology: v5e:2x2
jax: 0.10.0
libtpu: 0.0.40
codegen_flags: <defaults>
</compile_context>

<pallas_src>
import jax
import jax.numpy as jnp
from jax.experimental import pallas as pl
from jax.experimental.pallas import tpu as pltpu

_LANE = 128          # TPU vreg lane width
_SUBLANE_BF16 = 16   # bf16 packs 16 rows per sublane tile


def _round_up(n: int, m: int) -> int:
    return ((n + m - 1) // m) * m


# ----------------------------- Pallas kernel -------------------------------
def _mlp_fwd_kernel(x_ref, w1_ref, b1_ref, w2_ref, b2_ref, o_ref):
    # Layer 1: bf16 x bf16 -> f32 accumulate on the MXU; bias + ReLU in f32.
    x = x_ref[...].astype(jnp.bfloat16)
    h = jnp.dot(x, w1_ref[...], preferred_element_type=jnp.float32)
    h = jnp.maximum(h + b1_ref[...], 0.0)          # b1 is (1, H), broadcasts
    # Layer 2: re-cast activations to bf16 for the MXU, accumulate in f32.
    o = jnp.dot(h.astype(jnp.bfloat16), w2_ref[...],
                preferred_element_type=jnp.float32)
    o_ref[...] = (o + b2_ref[...]).astype(o_ref.dtype)


def mlp_forward_pallas(x, w1_bf16, b1, w2_bf16, b2, *, block_b=512):
    """Fused Linear->ReLU->Linear forward.

    x:        (B, D) float32
    w1_bf16:  (D, H) bfloat16
    b1:       (1, H) float32
    w2_bf16:  (H, Opad) bfloat16, Opad a multiple of 128 (zero-padded)
    b2:       (1, Opad) float32 (zero-padded)
    returns:  (Bp, Opad) float32  (caller slices back to (B, O))
    """
    B, D = x.shape
    H = w1_bf16.shape[1]
    o_pad = w2_bf16.shape[1]
    assert o_pad % _LANE == 0, "output feature dim must be lane-dense (x128)"

    # Batch tile: as large as requested, but at least a bf16 sublane tile.
    tb = min(block_b, _round_up(B, _SUBLANE_BF16))
    bp = _round_up(B, tb)
    if bp != B:
        x = jnp.pad(x, ((0, bp - B), (0, 0)))

    return pl.pallas_call(
        _mlp_fwd_kernel,
        out_shape=jax.ShapeDtypeStruct((bp, o_pad), jnp.float32),
        grid_spec=pl.GridSpec(
            grid=(bp // tb,),
            in_specs=[
                pl.BlockSpec((tb, D), lambda i: (i, 0)),      # x: batch-tiled
                pl.BlockSpec((D, H), lambda i: (0, 0)),       # W1: resident
                pl.BlockSpec((1, H), lambda i: (0, 0)),       # b1: resident
                pl.BlockSpec((H, o_pad), lambda i: (0, 0)),   # W2: resident
                pl.BlockSpec((1, o_pad), lambda i: (0, 0)),   # b2: resident
            ],
            out_specs=pl.BlockSpec((tb, o_pad), lambda i: (i, 0)),
        ),
        compiler_params=pltpu.CompilerParams(
            # Batch tiles are independent -> shard across TCs on v7x.
            dimension_semantics=("parallel",),
            vmem_limit_bytes=64 * 1024 * 1024,
        ),
    )(x, w1_bf16, b1, w2_bf16, b2)


# ------------------- ShardedDataParallel-equivalent wrapper ----------------
class ShardedDataParallelPallas:
    """JAX/Pallas analogue of fairscale's ShardedDataParallel wrapper.

    With world_size == 1 (single TPU process) the DDP-specific work in
    forward() is a no-op identity, so forward() == wrapped module forward.
    """

    def __init__(self, params, broadcast_buffers: bool = True, block_b: int = 512):
        w1, b1, w2, b2 = params
        self.out_features = w2.shape[1]
        o_pad = _round_up(self.out_features, _LANE)
        pad_o = o_pad - self.out_features

        # One-time parameter prep (analogous to wrapper __init__ setup):
        #  - cast weights to bf16 for the native MXU path
        #  - zero-pad the output feature dim so stores are lane-dense
        self._w1 = w1.astype(jnp.bfloat16)
        self._b1 = b1.reshape(1, -1).astype(jnp.float32)
        self._w2 = jnp.pad(w2, ((0, 0), (0, pad_o))).astype(jnp.bfloat16)
        self._b2 = jnp.pad(b2.reshape(1, -1), ((0, 0), (0, pad_o))).astype(jnp.float32)
        self._block_b = block_b

        self.enable_broadcast_buffers = broadcast_buffers
        self.should_accumulate_grads = False
        self.world_size_scaling = 1.0  # dist.get_world_size == 1
        # grad-reduce bookkeeping (host-side counters, mirrors _clear_counters)
        self._grad_to_be_reduced = [True] * 4

    def sync_buffers(self, blocking: bool = False):
        # TODO(synk): dist.broadcast of module buffers across ranks has no
        # single-device Pallas equivalent; with world_size==1 it is identity.
        return None

    def _clear_counters(self):
        if not self.should_accumulate_grads:
            self._grad_to_be_reduced = [True for _ in self._grad_to_be_reduced]

    def forward(self, x):
        if self.enable_broadcast_buffers:
            self.sync_buffers(blocking=True)
        self._clear_counters()
        B = x.shape[0]
        out = mlp_forward_pallas(x, self._w1, self._b1, self._w2, self._b2,
                                 block_b=self._block_b)
        # Slice off batch/feature padding added for lane-dense tiling.
        return out[:B, :self.out_features]

    __call__ = forward


# --------------------------------- main -------------------------------------
if __name__ == "__main__":
    B, D_IN, HID, D_OUT = 256, 32, 128, 64

    key = jax.random.PRNGKey(0)
    kx, k1, k2, k3, k4 = jax.random.split(key, 5)

    # Deterministic synthetic parameters (kaiming-ish scale), float32.
    x = jax.random.normal(kx, (B, D_IN), dtype=jnp.float32)
    w1 = jax.random.normal(k1, (D_IN, HID), dtype=jnp.float32) * (1.0 / D_IN) ** 0.5
    b1 = jax.random.normal(k2, (1, HID), dtype=jnp.float32) * 0.01
    w2 = jax.random.normal(k3, (HID, D_OUT), dtype=jnp.float32) * (1.0 / HID) ** 0.5
    b2 = jax.random.normal(k4, (1, D_OUT), dtype=jnp.float32) * 0.01

    # block_b=128 -> grid=(2,): exercises batch tiling / pipelining.
    model = ShardedDataParallelPallas(params=(w1, b1, w2, b2), block_b=128)

    out = model(x)
    out = jax.block_until_ready(out)

    # Reference with the same bf16-operand / f32-accumulate math as the kernel.
    xb = x.astype(jnp.bfloat16)
    w1b = w1.astype(jnp.bfloat16)
    w2b = w2.astype(jnp.bfloat16)
    h_ref = jnp.maximum(
        jnp.dot(xb, w1b, preferred_element_type=jnp.float32) + b1, 0.0)
    ref = jnp.dot(h_ref.astype(jnp.bfloat16), w2b,
                  preferred_element_type=jnp.float32) + b2

    assert out.shape == (B, D_OUT)
    assert jnp.allclose(out, ref, atol=2e-2, rtol=2e-2)
    # Looser sanity check against the pure-f32 reference semantics.
    ref_f32 = jnp.maximum(x @ w1 + b1, 0.0) @ w2 + b2
    assert jnp.allclose(out, ref_f32, atol=1e-1, rtol=1e-1)

    print("KERNEL_OK")
</pallas_src>

<mosaic_0001>
module attributes {stable_mosaic.version = 11 : i64} {
  func.func @_mlp_fwd_kernel(%arg0: i32, %arg1: memref<128x32xf32, #tpu.memory_space<vmem>>, %arg2: memref<32x128xbf16, #tpu.memory_space<vmem>>, %arg3: memref<1x128xf32, #tpu.memory_space<vmem>>, %arg4: memref<128x128xbf16, #tpu.memory_space<vmem>>, %arg5: memref<1x128xf32, #tpu.memory_space<vmem>>, %arg6: memref<128x128xf32, #tpu.memory_space<vmem>>) attributes {dimension_semantics = [#tpu.dimension_semantics<parallel>], iteration_bounds = array<i64: 2>, scalar_prefetch = 0 : i64, scratch_operands = 0 : i64, tpu.core_type = #tpu.core_type<tc>, window_params = [{transform_indices = @transform_0, window_bounds = array<i64: 128, 32>}, {pipeline_mode = #tpu.pipeline_mode<synchronous>, transform_indices = @transform_1, window_bounds = array<i64: 32, 128>}, {pipeline_mode = #tpu.pipeline_mode<synchronous>, transform_indices = @transform_2, window_bounds = array<i64: 1, 128>}, {pipeline_mode = #tpu.pipeline_mode<synchronous>, transform_indices = @transform_3, window_bounds = array<i64: 128, 128>}, {pipeline_mode = #tpu.pipeline_mode<synchronous>, transform_indices = @transform_4, window_bounds = array<i64: 1, 128>}, {transform_indices = @transform_5, window_bounds = array<i64: 128, 128>}]} {
    %c0 = arith.constant 0 : index
    %c0_0 = arith.constant 0 : index
    %0 = vector.load %arg1[%c0, %c0_0] : memref<128x32xf32, #tpu.memory_space<vmem>>, vector<128x32xf32>
    %1 = arith.truncf %0 : vector<128x32xf32> to vector<128x32xbf16>
    %c0_1 = arith.constant 0 : index
    %c0_2 = arith.constant 0 : index
    %2 = vector.load %arg2[%c0_1, %c0_2] : memref<32x128xbf16, #tpu.memory_space<vmem>>, vector<32x128xbf16>
    %cst = arith.constant dense<0.000000e+00> : vector<128x128xf32>
    %3 = tpu.matmul %1, %2, %cst {dimension_numbers = #tpu.dot_dimension_numbers<[1], [0], [0], [1], [0, 0, 1, 1], [], []>} : vector<128x32xbf16>, vector<32x128xbf16>, vector<128x128xf32> -> vector<128x128xf32>
    %c0_3 = arith.constant 0 : index
    %c0_4 = arith.constant 0 : index
    %4 = vector.load %arg3[%c0_3, %c0_4] : memref<1x128xf32, #tpu.memory_space<vmem>>, vector<1x128xf32>
    %5 = vector.broadcast %4 : vector<1x128xf32> to vector<128x128xf32>
    %6 = arith.addf %3, %5 : vector<128x128xf32>
    %cst_5 = arith.constant 0.000000e+00 : f32
    %7 = vector.broadcast %cst_5 : f32 to vector<128x128xf32>
    %8 = arith.maximumf %6, %7 : vector<128x128xf32>
    %9 = arith.truncf %8 : vector<128x128xf32> to vector<128x128xbf16>
    %c0_6 = arith.constant 0 : index
    %c0_7 = arith.constant 0 : index
    %10 = vector.load %arg4[%c0_6, %c0_7] : memref<128x128xbf16, #tpu.memory_space<vmem>>, vector<128x128xbf16>
    %cst_8 = arith.constant dense<0.000000e+00> : vector<128x128xf32>
    %11 = tpu.matmul %9, %10, %cst_8 {dimension_numbers = #tpu.dot_dimension_numbers<[1], [0], [0], [1], [0, 0, 1, 1], [], []>} : vector<128x128xbf16>, vector<128x128xbf16>, vector<128x128xf32> -> vector<128x128xf32>
    %c0_9 = arith.constant 0 : index
    %c0_10 = arith.constant 0 : index
    %12 = vector.load %arg5[%c0_9, %c0_10] : memref<1x128xf32, #tpu.memory_space<vmem>>, vector<1x128xf32>
    %13 = vector.broadcast %12 : vector<1x128xf32> to vector<128x128xf32>
    %14 = arith.addf %11, %13 : vector<128x128xf32>
    %c0_11 = arith.constant 0 : index
    %c0_12 = arith.constant 0 : index
    %15 = vector.load %arg6[%c0_11, %c0_12] : memref<128x128xf32, #tpu.memory_space<vmem>>, vector<128x128xf32>
    tpu.vector_store %arg6[%c0_11, %c0_12], %14 {strides = array<i32>} : memref<128x128xf32, #tpu.memory_space<vmem>>, vector<128x128xf32>,
    return
  }
  func.func @transform_0(%arg0: i32) -> (i32, i32) {
    %c0_i32 = arith.constant 0 : i32
    %c0_i32_0 = arith.constant 0 : i32
    return %arg0, %c0_i32 : i32, i32
  }
  func.func @transform_1(%arg0: i32) -> (i32, i32) {
    %c0_i32 = arith.constant 0 : i32
    %c0_i32_0 = arith.constant 0 : i32
    %c0_i32_1 = arith.constant 0 : i32
    return %c0_i32, %c0_i32_0 : i32, i32
  }
  func.func @transform_2(%arg0: i32) -> (i32, i32) {
    %c0_i32 = arith.constant 0 : i32
    %c0_i32_0 = arith.constant 0 : i32
    %c0_i32_1 = arith.constant 0 : i32
    return %c0_i32, %c0_i32_0 : i32, i32
  }
  func.func @transform_3(%arg0: i32) -> (i32, i32) {
    %c0_i32 = arith.constant 0 : i32
    %c0_i32_0 = arith.constant 0 : i32
    %c0_i32_1 = arith.constant 0 : i32
    return %c0_i32, %c0_i32_0 : i32, i32
  }
  func.func @transform_4(%arg0: i32) -> (i32, i32) {
    %c0_i32 = arith.constant 0 : i32
    %c0_i32_0 = arith.constant 0 : i32
    %c0_i32_1 = arith.constant 0 : i32
    return %c0_i32, %c0_i32_0 : i32, i32
  }
  func.func @transform_5(%arg0: i32) -> (i32, i32) {
    %c0_i32 = arith.constant 0 : i32
    %c0_i32_0 = arith.constant 0 : i32
    return %arg0, %c0_i32 : i32, i32
  }
}

</mosaic_0001>

<llo_original>
// kernel: tpu_custom_call.1
$region0: #{tpu_custom_call.1}
  #allocation0 [shape = 'u32[]', space=smem, size = 0x4, offset = 0x4, fixed_abs, tag = 'smem constant byte address 0x4 - core index']
  #allocation1 [shape = 'u32[72,128]{1,0:T(1,128)}', space=vmem, size = 0x9000, scoped, tag = 'internal scratch']
  %s0 = inlined_call_operand.vmem [shape: f32[256,32], index: 0, kind: input, shape index: {}]
  %s1 = inlined_call_operand.vmem [shape: bf16[32,128], index: 1, kind: input, shape index: {}]
  %s2 = inlined_call_operand.vmem [shape: f32[1,128], index: 2, kind: input, shape index: {}]
  %s3 = inlined_call_operand.vmem [shape: bf16[128,128], index: 3, kind: input, shape index: {}]
  %s4 = inlined_call_operand.vmem [shape: f32[1,128], index: 4, kind: input, shape index: {}]
  %s5 = inlined_call_operand.hbm [shape: f32[256,128], index: 5, kind: output, shape index: {}]
  %s6 = sld [smem:[#allocation0]]
  $region53: #{tpu_custom_call.1} parent=0
    _
  %s8 = ssub.s32 1, %s6
  %s9 = scalar_select 0, %s8, %s6
  $region1: #{tpu_custom_call.1} parent=0
    #allocation2 [shape = 'u8[131072]{0}', space=vmem, size = 0x20000, scoped, tag = 'output window, operand 0']
    #allocation3 [shape = 's32[2]{0}', space=sflag, size = 0x8, scoped, tag = 'scoped memory for tpu_custom_call.1']
    %10 = vsyncpa [#allocation3], 0
    %s11 = scalar_lea.sflag [#allocation3], 1
    %12 = vsyncpa %s11, 0
    loop: start=0, step=1, limit=4
    $region2: #{tpu_custom_call.1} parent=1 // loop_pre_header
      _
    $region3: #{tpu_custom_call.1} parent=1 // loop_header
      %s14 = sphi 0, %s18
      %p15 = scmp.ge.s32.totalorder %s14, 4
      %s24 = sphi 0, %s26
      %s27 = sphi 0, %s24
      %s28 = sphi 0, %s27
      %s44 = sphi 0, %s28
      %s48 = sphi 0, %s48
      %s50 = sphi 0, %s48
      %s51 = sphi 0, %s50
      %s65 = sphi 0, %s51
      %s69 = sphi 0, %s69
      %s71 = sphi 0, %s69
      %s72 = sphi 0, %s71
      %s86 = sphi 0, %s72
      %s90 = sphi 0, %s90
      %s92 = sphi 0, %s90
      %s93 = sphi 0, %s92
      %s107 = sphi 0, %s93
      %s111 = sphi 0, %s111
      %s113 = sphi 0, %s111
      %s114 = sphi 0, %s113
      %s128 = sphi 0, %s114
      %s134 = sphi 0, %s136
      %s137 = sphi 0, %s134
      %s138 = sphi 0, %s137
      %s154 = sphi 0, %s138
    $region4: #{tpu_custom_call.1} parent=1 // loop_header_branch
      %17 = sbr.rel (%p15) target = $region8
    $region5: #{tpu_custom_call.1} parent=1 // loop_body
      %s19 = ssub.s32 %s14, 1
      %s20 = ssub.s32 %s14, 2
      %s21 = sadd.s32 %s14, 1
      %s22 = ssub.s32 %s14, %s21
      %p23 = scmp.eq.s32.totalorder %s22, 0
      %s25 = sadd.s32 %s24, 1
      %s26 = scalar_select %p23, %s24, %s25
      %p29 = pneg %p23
      %p30 = scmp.eq.s32.totalorder %s14, 1
      %p31 = por %p29, %p30
      %p32 = scmp.ne.s32.totalorder %s24, %s27
      %p33 = scmp.eq.s32.totalorder %s14, 0
      %p34 = por %p32, %p33
      %p35 = scmp.ne.s32.totalorder %s24, %s27
      %p36 = scmp.eq.s32.totalorder %s19, 1
      %p37 = por %p35, %p36
      %p38 = scmp.ne.s32.totalorder %s27, %s28
      %p39 = scmp.eq.s32.totalorder %s19, 0
      %p40 = por %p38, %p39
      %p41 = scmp.ne.s32.totalorder %s27, %s28
      %p42 = scmp.eq.s32.totalorder %s20, 1
      %p43 = por %p41, %p42
      %p45 = scmp.ne.s32.totalorder %s28, %s44
      %p46 = scmp.eq.s32.totalorder %s20, 0
      %p47 = por %p45, %p46
      %s49 = sadd.s32 %s48, 1
      %p52 = scmp.eq.s32.totalorder %s14, 1
      %p53 = scmp.ne.s32.totalorder %s48, %s50
      %p54 = scmp.eq.s32.totalorder %s14, 0
      %p55 = por %p53, %p54
      %p56 = scmp.ne.s32.totalorder %s48, %s50
      %p57 = scmp.eq.s32.totalorder %s19, 1
      %p58 = por %p56, %p57
      %p59 = scmp.ne.s32.totalorder %s50, %s51
      %p60 = scmp.eq.s32.totalorder %s19, 0
      %p61 = por %p59, %p60
      %p62 = scmp.ne.s32.totalorder %s50, %s51
      %p63 = scmp.eq.s32.totalorder %s20, 1
      %p64 = por %p62, %p63
      %p66 = scmp.ne.s32.totalorder %s51, %s65
      %p67 = scmp.eq.s32.totalorder %s20, 0
      %p68 = por %p66, %p67
      %s70 = sadd.s32 %s69, 1
      %p73 = scmp.eq.s32.totalorder %s14, 1
      %p74 = scmp.ne.s32.totalorder %s69, %s71
      %p75 = scmp.eq.s32.totalorder %s14, 0
      %p76 = por %p74, %p75
      %p77 = scmp.ne.s32.totalorder %s69, %s71
      %p78 = scmp.eq.s32.totalorder %s19, 1
      %p79 = por %p77, %p78
      %p80 = scmp.ne.s32.totalorder %s71, %s72
      %p81 = scmp.eq.s32.totalorder %s19, 0
      %p82 = por %p80, %p81
      %p83 = scmp.ne.s32.totalorder %s71, %s72
      %p84 = scmp.eq.s32.totalorder %s20, 1
      %p85 = por %p83, %p84
      %p87 = scmp.ne.s32.totalorder %s72, %s86
      %p88 = scmp.eq.s32.totalorder %s20, 0
      %p89 = por %p87, %p88
      %s91 = sadd.s32 %s90, 1
      %p94 = scmp.eq.s32.totalorder %s14, 1
      %p95 = scmp.ne.s32.totalorder %s90, %s92
      %p96 = scmp.eq.s32.totalorder %s14, 0
      %p97 = por %p95, %p96
      %p98 = scmp.ne.s32.totalorder %s90, %s92
      %p99 = scmp.eq.s32.totalorder %s19, 1
      %p100 = por %p98, %p99
      %p101 = scmp.ne.s32.totalorder %s92, %s93
      %p102 = scmp.eq.s32.totalorder %s19, 0
      %p103 = por %p101, %p102
      %p104 = scmp.ne.s32.totalorder %s92, %s93
      %p105 = scmp.eq.s32.totalorder %s20, 1
      %p106 = por %p104, %p105
      %p108 = scmp.ne.s32.totalorder %s93, %s107
      %p109 = scmp.eq.s32.totalorder %s20, 0
      %p110 = por %p108, %p109
      %s112 = sadd.s32 %s111, 1
      %p115 = scmp.eq.s32.totalorder %s14, 1
      %p116 = scmp.ne.s32.totalorder %s111, %s113
      %p117 = scmp.eq.s32.totalorder %s14, 0
      %p118 = por %p116, %p117
      %p119 = scmp.ne.s32.totalorder %s111, %s113
      %p120 = scmp.eq.s32.totalorder %s19, 1
      %p121 = por %p119, %p120
      %p122 = scmp.ne.s32.totalorder %s113, %s114
      %p123 = scmp.eq.s32.totalorder %s19, 0
      %p124 = por %p122, %p123
      %p125 = scmp.ne.s32.totalorder %s113, %s114
      %p126 = scmp.eq.s32.totalorder %s20, 1
      %p127 = por %p125, %p126
      %p129 = scmp.ne.s32.totalorder %s114, %s128
      %p130 = scmp.eq.s32.totalorder %s20, 0
      %p131 = por %p129, %p130
      %s132 = ssub.s32 %s14, %s21
      %p133 = scmp.eq.s32.totalorder %s132, 0
      %s135 = sadd.s32 %s134, 1
      %s136 = scalar_select %p133, %s134, %s135
      %p139 = pneg %p133
      %p140 = scmp.eq.s32.totalorder %s14, 1
      %p141 = por %p139, %p140
      %p142 = scmp.ne.s32.totalorder %s134, %s137
      %p143 = scmp.eq.s32.totalorder %s14, 0
      %p144 = por %p142, %p143
      %p145 = scmp.ne.s32.totalorder %s134, %s137
      %p146 = scmp.eq.s32.totalorder %s19, 1
      %p147 = por %p145, %p146
      %p148 = scmp.ne.s32.totalorder %s137, %s138
      %p149 = scmp.eq.s32.totalorder %s19, 0
      %p150 = por %p148, %p149
      %p151 = scmp.ne.s32.totalorder %s137, %s138
      %p152 = scmp.eq.s32.totalorder %s20, 1
      %p153 = por %p151, %p152
      %p155 = scmp.ne.s32.totalorder %s138, %s154
      %p156 = scmp.eq.s32.totalorder %s20, 0
      %p157 = por %p155, %p156
      %p158 = scmp.le.s32.totalorder 1, %s14
      %p159 = scmp.lt.s32.totalorder %s14, 3
      %p160 = pnand %p158, %p159
      %p161 = pneg %p160
      // Predicated region
      $region9: #{tpu_custom_call.1} parent=5 // pred_check
        _
      $region10: #{tpu_custom_call.1} parent=5 // pred_check_branch
        %163 = sbr.rel (%p160) target = $region12
      $region11: #{tpu_custom_call.1} parent=5 // pred_region
        %s164 = ssub.s32 %s14, 1
        // Predicated region
        $region13: #{tpu_custom_call.1} parent=11 // pred_check
          %p165 = pneg %p61
        $region14: #{tpu_custom_call.1} parent=11 // pred_check_branch
          %167 = sbr.rel (%p165) target = $region16
        $region15: #{tpu_custom_call.1} parent=11 // pred_region
          _
        $region16: #{tpu_custom_call.1} parent=11 // pred_fallthru
          _
        // Predicated region
        $region17: #{tpu_custom_call.1} parent=11 // pred_check
          %p168 = pneg %p82
        $region18: #{tpu_custom_call.1} parent=11 // pred_check_branch
          %170 = sbr.rel (%p168) target = $region20
        $region19: #{tpu_custom_call.1} parent=11 // pred_region
          _
        $region20: #{tpu_custom_call.1} parent=11 // pred_fallthru
          _
        // Predicated region
        $region21: #{tpu_custom_call.1} parent=11 // pred_check
          %p171 = pneg %p103
        $region22: #{tpu_custom_call.1} parent=11 // pred_check_branch
          %173 = sbr.rel (%p171) target = $region24
        $region23: #{tpu_custom_call.1} parent=11 // pred_region
          _
        $region24: #{tpu_custom_call.1} parent=11 // pred_fallthru
          _
        // Predicated region
        $region25: #{tpu_custom_call.1} parent=11 // pred_check
          %p174 = pneg %p124
        $region26: #{tpu_custom_call.1} parent=11 // pred_check_branch
          %176 = sbr.rel (%p174) target = $region28
        $region27: #{tpu_custom_call.1} parent=11 // pred_region
          _
        $region28: #{tpu_custom_call.1} parent=11 // pred_fallthru
          _
      $region12: #{tpu_custom_call.1} parent=5 // pred_fallthru
        _
      %p177 = scmp.lt.s32.totalorder %s14, 2
      // Predicated region
      $region29: #{tpu_custom_call.1} parent=5 // pred_check
        %p178 = pneg %p177
      $region30: #{tpu_custom_call.1} parent=5 // pred_check_branch
        %180 = sbr.rel (%p178) target = $region32
      $region31: #{tpu_custom_call.1} parent=5 // pred_region
        // Predicated region
        $region33: #{tpu_custom_call.1} parent=31 // pred_check
          %p181 = pneg %p34
        $region34: #{tpu_custom_call.1} parent=31 // pred_check_branch
          %183 = sbr.rel (%p181) target = $region36
        $region35: #{tpu_custom_call.1} parent=31 // pred_region
          %s184 = smul.u32 16, %s14
          %p185 = scmp.lt.s32.totalorder %s184, 31
          %s186 = scalar_select %p185, %s184, 31
          %s187 = smul.addr %s186, 8
          %s188 = scalar_lea.vmem %s0, %s187
          %s189 = smul.u32 16, %s14
        $region36: #{tpu_custom_call.1} parent=31 // pred_fallthru
          _
      $region32: #{tpu_custom_call.1} parent=5 // pred_fallthru
        _
      %p190 = scmp.le.s32.totalorder 1, %s14
      %p191 = scmp.lt.s32.totalorder %s14, 3
      %p192 = pnand %p190, %p191
      %p193 = pneg %p192
      // Predicated region
      $region37: #{tpu_custom_call.1} parent=5 // pred_check
        _
      $region38: #{tpu_custom_call.1} parent=5 // pred_check_branch
        %195 = sbr.rel (%p192) target = $region40
      $region39: #{tpu_custom_call.1} parent=5 // pred_region
        %s196 = ssub.s32 %s14, 1
        %s197 = smul.u32 16, %s19
        %p198 = scmp.lt.s32.totalorder %s197, 31
        %s199 = scalar_select %p198, %s197, 31
        %s200 = smul.addr %s199, 8
        %s201 = scalar_lea.vmem %s0, %s200
        %p202 = pneg %p40
        %p203 = pneg %p37
        %p204 = pneg %p61
        %p205 = pneg %p58
        %p206 = pneg %p82
        %p207 = pneg %p79
        %p208 = pneg %p103
        %p209 = pneg %p100
        %p210 = pneg %p124
        %p211 = pneg %p121
        %p212 = pneg %p150
        %p213 = pneg %p147
        %s214 = sand.u32 %s137, 1
        %s215 = scalar_lea.sflag [#allocation3], %s214
        %s216 = sand.u32 %s137, 1
        %s217 = smul.addr %s216, 128
        %s218 = scalar_lea.vmem [#allocation2], %s217
        %s219 = smul.u32 16, %s19
        %p220 = scmp.lt.s32.totalorder %s219, 31
        %s221 = scalar_select %p220, %s219, 31
        %s222 = smul.addr %s221, 8
        %s223 = scalar_lea.vmem %s0, %s222
        %s224 = smul.u32 16, %s19
        %s225 = smul.u32 16, %s19
        %v227 = vld [vmem:[%s223] sm:$0xff]
        %v228 = vld [vmem:[%s223 + $0x8] sm:$0xff]
        %v229 = vld [vmem:[%s223 + $0x10] sm:$0xff]
        %v230 = vld [vmem:[%s223 + $0x18] sm:$0xff]
        %v231 = vld [vmem:[%s223 + $0x20] sm:$0xff]
        %v232 = vld [vmem:[%s223 + $0x28] sm:$0xff]
        %v233 = vld [vmem:[%s223 + $0x30] sm:$0xff]
        %v234 = vld [vmem:[%s223 + $0x38] sm:$0xff]
        %v235 = vld [vmem:[%s223 + $0x40] sm:$0xff]
        %v236 = vld [vmem:[%s223 + $0x48] sm:$0xff]
        %v237 = vld [vmem:[%s223 + $0x50] sm:$0xff]
        %v238 = vld [vmem:[%s223 + $0x58] sm:$0xff]
        %v239 = vld [vmem:[%s223 + $0x60] sm:$0xff]
        %v240 = vld [vmem:[%s223 + $0x68] sm:$0xff]
        %v241 = vld [vmem:[%s223 + $0x70] sm:$0xff]
        %v242 = vld [vmem:[%s223 + $0x78] sm:$0xff]
        %v243 = vpack.c.bf16 %v228, %v227
        %v244 = vpack.c.bf16 %v230, %v229
        %v245 = vpack.c.bf16 %v232, %v231
        %v246 = vpack.c.bf16 %v234, %v233
        %v247 = vpack.c.bf16 %v236, %v235
        %v248 = vpack.c.bf16 %v238, %v237
        %v249 = vpack.c.bf16 %v240, %v239
        %v250 = vpack.c.bf16 %v242, %v241
        %v251 = vld [vmem:[%s1] sm:$0xf]
        %v252 = vld [vmem:[%s1 + $0x4] sm:$0xf]
        %v253 = vld [vmem:[%s1 + $0x8] sm:$0xf]
        %v254 = vld [vmem:[%s1 + $0xc] sm:$0xf]
        %v255 = vld [vmem:[%s2] sm:$0x1]
        %v257 = vperm.slane %v255, 0
        %v263 = vunpack.c.l.b16 %v251
        %v264 = vunpack.c.l.b16 %v252
        %v265 = vunpack.c.l.b16 %v253
        %v266 = vunpack.c.l.b16 %v254
        %v267 = vpack.c.b16 %v264, %v263
        %v268 = vpack.c.b16 %v266, %v265
        %vm271 = vcmask 261120
        %v273 = vsel %vm271, %v243, 0
        %v276 = vsel %vm271, %v244, 0
        %v279 = vsel %vm271, %v245, 0
        %v282 = vsel %vm271, %v246, 0
        %v285 = vsel %vm271, %v247, 0
        %v288 = vsel %vm271, %v248, 0
        %v291 = vsel %vm271, %v249, 0
        %v294 = vsel %vm271, %v250, 0
        %296 = vmatpush.bf16.msra.mxu0 0
        %297 = vmatpush.bf16.msra.mxu0 0
        %298 = vmatpush.bf16.msra.mxu0 0
        %299 = vmatpush.bf16.msra.mxu0 0
        %300 = vmatpush.bf16.msra.mxu0 0
        %301 = vmatpush.bf16.msra.mxu0 0
        %302 = vmatpush.bf16.msra.mxu0 %v268
        %303 = vmatpush.bf16.msra.mxu0 %v267
        %304 = vmatmul.bf16.gmra.mxu0 %v273
        %v305 = vpop.f32.mrf.mxu0
        %v306 = vadd.f32 %v257, %v305
        %v307 = vpop.f32.mrf.mxu0
        %v308 = vadd.f32 %v257, %v307
        %309 = vmatmul.bf16.gmra.mxu0 %v276
        %v310 = vpop.f32.mrf.mxu0
        %v311 = vadd.f32 %v257, %v310
        %v312 = vpop.f32.mrf.mxu0
        %v313 = vadd.f32 %v257, %v312
        %314 = vmatmul.bf16.gmra.mxu0 %v279
        %v315 = vpop.f32.mrf.mxu0
        %v316 = vadd.f32 %v257, %v315
        %v317 = vpop.f32.mrf.mxu0
        %v318 = vadd.f32 %v257, %v317
        %319 = vmatmul.bf16.gmra.mxu0 %v282
        %v320 = vpop.f32.mrf.mxu0
        %v321 = vadd.f32 %v257, %v320
        %v322 = vpop.f32.mrf.mxu0
        %v323 = vadd.f32 %v257, %v322
        %324 = vmatmul.bf16.gmra.mxu0 %v285
        %v325 = vpop.f32.mrf.mxu0
        %v326 = vadd.f32 %v257, %v325
        %v327 = vpop.f32.mrf.mxu0
        %v328 = vadd.f32 %v257, %v327
        %329 = vmatmul.bf16.gmra.mxu0 %v288
        %v330 = vpop.f32.mrf.mxu0
        %v331 = vadd.f32 %v257, %v330
        %v332 = vpop.f32.mrf.mxu0
        %v333 = vadd.f32 %v257, %v332
        %334 = vmatmul.bf16.gmra.mxu0 %v291
        %v335 = vpop.f32.mrf.mxu0
        %v336 = vadd.f32 %v257, %v335
        %v337 = vpop.f32.mrf.mxu0
        %v338 = vadd.f32 %v257, %v337
        %339 = vmatmul.bf16.gmra.mxu0 %v294
        %v340 = vpop.f32.mrf.mxu0
        %v341 = vadd.f32 %v257, %v340
        %v342 = vpop.f32.mrf.mxu0
        %v343 = vadd.f32 %v257, %v342
        %344 = vdwg.mxu0
        %v345 = vmax.f32 %v306, 0.0
        %v346 = vmax.f32 %v308, 0.0
        %v347 = vmax.f32 %v311, 0.0
        %v348 = vmax.f32 %v313, 0.0
        %v349 = vmax.f32 %v316, 0.0
        %v350 = vmax.f32 %v318, 0.0
        %v351 = vmax.f32 %v321, 0.0
        %v352 = vmax.f32 %v323, 0.0
        %v353 = vmax.f32 %v326, 0.0
        %v354 = vmax.f32 %v328, 0.0
        %v355 = vmax.f32 %v331, 0.0
        %v356 = vmax.f32 %v333, 0.0
        %v357 = vmax.f32 %v336, 0.0
        %v358 = vmax.f32 %v338, 0.0
        %v359 = vmax.f32 %v341, 0.0
        %v360 = vmax.f32 %v343, 0.0
        %v361 = vpack.c.bf16 %v346, %v345
        %v362 = vpack.c.bf16 %v348, %v347
        %v363 = vpack.c.bf16 %v350, %v349
        %v364 = vpack.c.bf16 %v352, %v351
        %v365 = vpack.c.bf16 %v354, %v353
        %v366 = vpack.c.bf16 %v356, %v355
        %v367 = vpack.c.bf16 %v358, %v357
        %v368 = vpack.c.bf16 %v360, %v359
        %v369 = vld [vmem:[%s3] sm:$0xf]
        %v370 = vld [vmem:[%s3 + $0x4] sm:$0xf]
        %v371 = vld [vmem:[%s3 + $0x8] sm:$0xf]
        %v372 = vld [vmem:[%s3 + $0xc] sm:$0xf]
        %v373 = vld [vmem:[%s3 + $0x10] sm:$0xf]
        %v374 = vld [vmem:[%s3 + $0x14] sm:$0xf]
        %v375 = vld [vmem:[%s3 + $0x18] sm:$0xf]
        %v376 = vld [vmem:[%s3 + $0x1c] sm:$0xf]
        %v377 = vld [vmem:[%s3 + $0x20] sm:$0xf]
        %v378 = vld [vmem:[%s3 + $0x24] sm:$0xf]
        %v379 = vld [vmem:[%s3 + $0x28] sm:$0xf]
        %v380 = vld [vmem:[%s3 + $0x2c] sm:$0xf]
        %v381 = vld [vmem:[%s3 + $0x30] sm:$0xf]
        %v382 = vld [vmem:[%s3 + $0x34] sm:$0xf]
        %v383 = vld [vmem:[%s3 + $0x38] sm:$0xf]
        %v384 = vld [vmem:[%s3 + $0x3c] sm:$0xf]
        %v385 = vld [vmem:[%s4] sm:$0x1]
        %v387 = vperm.slane %v385, 0
        %v405 = vunpack.c.l.b16 %v369
        %v406 = vunpack.c.l.b16 %v370
        %v407 = vunpack.c.l.b16 %v371
        %v408 = vunpack.c.l.b16 %v372
        %v409 = vunpack.c.l.b16 %v373
        %v410 = vunpack.c.l.b16 %v374
        %v411 = vunpack.c.l.b16 %v375
        %v412 = vunpack.c.l.b16 %v376
        %v413 = vunpack.c.l.b16 %v377
        %v414 = vunpack.c.l.b16 %v378
        %v415 = vunpack.c.l.b16 %v379
        %v416 = vunpack.c.l.b16 %v380
        %v417 = vunpack.c.l.b16 %v381
        %v418 = vunpack.c.l.b16 %v382
        %v419 = vunpack.c.l.b16 %v383
        %v420 = vunpack.c.l.b16 %v384
        %v421 = vpack.c.b16 %v406, %v405
        %v422 = vpack.c.b16 %v408, %v407
        %v423 = vpack.c.b16 %v410, %v409
        %v424 = vpack.c.b16 %v412, %v411
        %v425 = vpack.c.b16 %v414, %v413
        %v426 = vpack.c.b16 %v416, %v415
        %v427 = vpack.c.b16 %v418, %v417
        %v428 = vpack.c.b16 %v420, %v419
        %437 = vmatpush.bf16.msra.mxu0 %v428
        %438 = vmatpush.bf16.msra.mxu0 %v427
        %439 = vmatpush.bf16.msra.mxu0 %v426
        %440 = vmatpush.bf16.msra.mxu0 %v425
        %441 = vmatpush.bf16.msra.mxu0 %v424
        %442 = vmatpush.bf16.msra.mxu0 %v423
        %443 = vmatpush.bf16.msra.mxu0 %v422
        %444 = vmatpush.bf16.msra.mxu0 %v421
        %445 = vmatmul.bf16.gmra.mxu0 %v361
        %v446 = vpop.f32.mrf.mxu0
        %v447 = vadd.f32 %v387, %v446
        %v448 = vpop.f32.mrf.mxu0
        %v449 = vadd.f32 %v387, %v448
        %450 = vmatmul.bf16.gmra.mxu0 %v362
        %v451 = vpop.f32.mrf.mxu0
        %v452 = vadd.f32 %v387, %v451
        %v453 = vpop.f32.mrf.mxu0
        %v454 = vadd.f32 %v387, %v453
        %455 = vmatmul.bf16.gmra.mxu0 %v363
        %v456 = vpop.f32.mrf.mxu0
        %v457 = vadd.f32 %v387, %v456
        %v458 = vpop.f32.mrf.mxu0
        %v459 = vadd.f32 %v387, %v458
        %460 = vmatmul.bf16.gmra.mxu0 %v364
        %v461 = vpop.f32.mrf.mxu0
        %v462 = vadd.f32 %v387, %v461
        %v463 = vpop.f32.mrf.mxu0
        %v464 = vadd.f32 %v387, %v463
        %465 = vmatmul.bf16.gmra.mxu0 %v365
        %v466 = vpop.f32.mrf.mxu0
        %v467 = vadd.f32 %v387, %v466
        %v468 = vpop.f32.mrf.mxu0
        %v469 = vadd.f32 %v387, %v468
        %470 = vmatmul.bf16.gmra.mxu0 %v366
        %v471 = vpop.f32.mrf.mxu0
        %v472 = vadd.f32 %v387, %v471
        %v473 = vpop.f32.mrf.mxu0
        %v474 = vadd.f32 %v387, %v473
        %475 = vmatmul.bf16.gmra.mxu0 %v367
        %v476 = vpop.f32.mrf.mxu0
        %v477 = vadd.f32 %v387, %v476
        %v478 = vpop.f32.mrf.mxu0
        %v479 = vadd.f32 %v387, %v478
        %480 = vmatmul.bf16.gmra.mxu0 %v368
        %v481 = vpop.f32.mrf.mxu0
        %v482 = vadd.f32 %v387, %v481
        %v483 = vpop.f32.mrf.mxu0
        %v484 = vadd.f32 %v387, %v483
        %485 = vdwg.mxu0
        %486 = vst [vmem:[%s218] sm:$0xff] %v447
        %487 = vst [vmem:[%s218 + $0x8] sm:$0xff] %v449
        %488 = vst [vmem:[%s218 + $0x10] sm:$0xff] %v452
        %489 = vst [vmem:[%s218 + $0x18] sm:$0xff] %v454
        %490 = vst [vmem:[%s218 + $0x20] sm:$0xff] %v457
        %491 = vst [vmem:[%s218 + $0x28] sm:$0xff] %v459
        %492 = vst [vmem:[%s218 + $0x30] sm:$0xff] %v462
        %493 = vst [vmem:[%s218 + $0x38] sm:$0xff] %v464
        %494 = vst [vmem:[%s218 + $0x40] sm:$0xff] %v467
        %495 = vst [vmem:[%s218 + $0x48] sm:$0xff] %v469
        %496 = vst [vmem:[%s218 + $0x50] sm:$0xff] %v472
        %497 = vst [vmem:[%s218 + $0x58] sm:$0xff] %v474
        %498 = vst [vmem:[%s218 + $0x60] sm:$0xff] %v477
        %499 = vst [vmem:[%s218 + $0x68] sm:$0xff] %v479
        %500 = vst [vmem:[%s218 + $0x70] sm:$0xff] %v482
        %501 = vst [vmem:[%s218 + $0x78] sm:$0xff] %v484
        %s502 = sand.u32 %s137, 1
        %s503 = scalar_lea.sflag [#allocation3], %s502
        %s504 = sand.u32 %s137, 1
        %s505 = smul.addr %s504, 128
        %s506 = scalar_lea.vmem [#allocation2], %s505
        // Predicated region
        $region41: #{tpu_custom_call.1} parent=39 // pred_check
          %p507 = pneg %p147
        $region42: #{tpu_custom_call.1} parent=39 // pred_check_branch
          %509 = sbr.rel (%p507) target = $region44
        $region43: #{tpu_custom_call.1} parent=39 // pred_region
          %s510 = smul.u32 16, %s19
          %512 = vsyncadd %s503, 0
          %s513 = smul.addr %s510, 8
          %s514 = scalar_lea.hbm %s5, %s513
          %s515 = sshll.u32 %s506, 4
          %s516 = int_to_ptr.vmem [resolvable:$true] %s515
          %s517 = sshll.u32 %s514, 4
          %s518 = int_to_ptr.hbm [resolvable:$true] %s517
          %523 = dma.vmem_to_hbm [thread:$0]  %s516, 2048, %s518, %s503, 128, 128, 8
        $region44: #{tpu_custom_call.1} parent=39 // pred_fallthru
          _
      $region40: #{tpu_custom_call.1} parent=5 // pred_fallthru
        _
      %p524 = scmp.le.s32.totalorder 2, %s14
      // Predicated region
      $region45: #{tpu_custom_call.1} parent=5 // pred_check
        %p525 = pneg %p524
      $region46: #{tpu_custom_call.1} parent=5 // pred_check_branch
        %527 = sbr.rel (%p525) target = $region48
      $region47: #{tpu_custom_call.1} parent=5 // pred_region
        %s528 = ssub.s32 %s14, 2
        // Predicated region
        $region49: #{tpu_custom_call.1} parent=47 // pred_check
          %p529 = pneg %p153
        $region50: #{tpu_custom_call.1} parent=47 // pred_check_branch
          %531 = sbr.rel (%p529) target = $region52
        $region51: #{tpu_custom_call.1} parent=47 // pred_region
          %s532 = sand.u32 %s138, 1
          %s533 = scalar_lea.sflag [#allocation3], %s532
          %s534 = sand.u32 %s138, 1
          %s535 = smul.addr %s534, 128
          %s536 = scalar_lea.vmem [#allocation2], %s535
          %538 = dma.done %s533, 2048
        $region52: #{tpu_custom_call.1} parent=47 // pred_fallthru
          _
      $region48: #{tpu_custom_call.1} parent=5 // pred_fallthru
        _
    $region6: #{tpu_custom_call.1} parent=1 // loop_footer
      %s18 = sadd.s32 1, %s14
    $region7: #{tpu_custom_call.1} parent=1 // loop_footer_branch
      %13 = sbr.rel target = $region3
    $region8: #{tpu_custom_call.1} parent=1 // loop_exit
      _
    %539 = vsyncpa [#allocation3], 1
    %s540 = scalar_lea.sflag [#allocation3], 1
    %541 = vsyncpa %s540, 1

</llo_original>
